<compile_context>
chip_gen: v5e
topology: v5e:2x2
jax: 0.10.0
libtpu: 0.0.40
codegen_flags: <defaults>
</compile_context>

<pallas_src>
import functools

import numpy as np
import jax
import jax.numpy as jnp
from jax.experimental import pallas as pl
from jax.experimental.pallas import tpu as pltpu


def _round_up(v: int, m: int) -> int:
    return ((v + m - 1) // m) * m


def _film_siren_kernel(x_ref, wt_ref, freq_ref, c_ref, o_ref, *, compute_dtype):
    # x_ref:    (1, TN, D_in)  tile of sequence rows for one batch element
    # wt_ref:   (D_in, H)      transposed Linear weight (resident, lane-dense in H)
    # freq_ref: (1, 1, H)      FiLM frequency for this batch element
    # c_ref:    (1, 1, H)      freq*bias + phase  (bias folded into FiLM affine)
    # o_ref:    (1, TN, H)
    x = x_ref[0].astype(compute_dtype)                                   # (TN, D_in)
    y = jnp.dot(x, wt_ref[...], preferred_element_type=jnp.float32)      # MXU: (TN, H)
    y = freq_ref[0] * y + c_ref[0]                                       # single affine
    o_ref[0] = jnp.sin(y).astype(o_ref.dtype)                            # transcendental


def _choose_tile_n(n_dim, b_dim, d_in, h_dim, x_itemsize, out_itemsize, w_itemsize,
                   *, max_tile_n=2048, min_grid_steps=8):
    """Pick the sequence-tile size from the chip's VMEM budget."""
    try:
        vmem_cap = int(pltpu.get_tpu_info().vmem_capacity_bytes)
    except Exception:
        vmem_cap = 64 << 20  # conservative fallback (v7x per-TC VMEM)

    # Budget for the double-buffered, pipelined x/out blocks: a quarter of
    # physical VMEM, capped at 16 MiB (tiles beyond ~1024 rows show no gain).
    budget = min(vmem_cap // 4, 16 << 20)
    weight_bytes = d_in * h_dim * w_itemsize
    per_row = 2 * (d_in * x_itemsize + h_dim * out_itemsize)  # 2x: double buffer
    tn_budget = max(8, (budget - 2 * weight_bytes) // max(per_row, 1))

    # Keep enough grid steps so both v7x TensorCores get work and the
    # double-buffer pipeline still overlaps DMA with compute.
    tiles_wanted = max(1, -(-min_grid_steps // max(b_dim, 1)))
    tn_steps = -(-n_dim // tiles_wanted)

    tn = min(tn_budget, tn_steps, max_tile_n, _round_up(n_dim, 8))
    tn = max(8, (tn // 8) * 8)  # sublane-aligned
    return tn, vmem_cap


def film_siren_forward(x, freq, phase_shift, weight, bias, *,
                       compute_dtype=jnp.bfloat16):
    """FilmSirenLayer forward.

    x:           (B, N, D_in) float32
    freq:        (B, H)       float32
    phase_shift: (B, H)       float32
    weight:      (H, D_in)    float32   (nn.Linear weight)
    bias:        (H,)         float32   (nn.Linear bias)
    returns:     (B, N, H)    x.dtype == sin(freq[:,None,:]*(x @ W.T + b) + phase[:,None,:])
    """
    b_dim, n_dim, d_in = x.shape
    h_dim, d_in_w = weight.shape
    assert d_in_w == d_in
    assert freq.shape == (b_dim, h_dim)
    assert phase_shift.shape == (b_dim, h_dim)

    x_sz = jnp.dtype(x.dtype).itemsize
    o_sz = jnp.dtype(x.dtype).itemsize
    w_sz = jnp.dtype(compute_dtype).itemsize

    tn, vmem_cap = _choose_tile_n(n_dim, b_dim, d_in, h_dim, x_sz, o_sz, w_sz)
    grid = (b_dim, pl.cdiv(n_dim, tn))

    # Operand prep (all O(B*H) or one-time O(D_in*H)):
    wt = weight.T.astype(compute_dtype)                        # (D_in, H) lane-dense RHS
    freq3 = freq.reshape(b_dim, 1, h_dim).astype(jnp.float32)  # (B, 1, H)
    c3 = (freq * bias[None, :] + phase_shift).reshape(b_dim, 1, h_dim).astype(jnp.float32)

    # Explicit VMEM limit with headroom: default scoped limits (16 MiB on v5e,
    # 32 MiB elsewhere) may be smaller than what the large tile needs.
    footprint = (2 * tn * (d_in * x_sz + h_dim * o_sz)   # double-buffered x + out blocks
                 + 2 * d_in * h_dim * w_sz               # (double-buffered) weight
                 + 4 * 2 * h_dim * 4                     # freq/c blocks
                 + (1 << 20))                            # slack
    vmem_limit = int(min(max(vmem_cap - (2 << 20), 1 << 20),
                         max(2 * footprint, 32 << 20)))

    kernel = functools.partial(_film_siren_kernel, compute_dtype=compute_dtype)

    return pl.pallas_call(
        kernel,
        out_shape=jax.ShapeDtypeStruct((b_dim, n_dim, h_dim), x.dtype),
        grid_spec=pl.GridSpec(
            grid=grid,
            in_specs=[
                pl.BlockSpec((1, tn, d_in), lambda b, n: (b, n, 0)),
                pl.BlockSpec((d_in, h_dim), lambda b, n: (0, 0)),
                pl.BlockSpec((1, 1, h_dim), lambda b, n: (b, 0, 0)),
                pl.BlockSpec((1, 1, h_dim), lambda b, n: (b, 0, 0)),
            ],
            out_specs=pl.BlockSpec((1, tn, h_dim), lambda b, n: (b, n, 0)),
        ),
        compiler_params=pltpu.CompilerParams(
            dimension_semantics=("parallel", "parallel"),
            vmem_limit_bytes=vmem_limit,
        ),
    )(x, wt, freq3, c3)


def _reference(x: np.ndarray, freq: np.ndarray, phase: np.ndarray,
               weight: np.ndarray, bias: np.ndarray) -> np.ndarray:
    out = x @ weight.T + bias                                   # (B, N, H)
    return np.sin(freq[:, None, :] * out + phase[:, None, :]).astype(np.float32)


def _make_inputs(key, B, N, D_IN, H):
    k1, k2, k3, k4, k5 = jax.random.split(key, 5)
    x = jax.random.normal(k1, (B, N, D_IN), dtype=jnp.float32)
    freq = jax.random.uniform(k2, (B, H), jnp.float32, 0.5, 1.5)
    phase_shift = jax.random.uniform(k3, (B, H), jnp.float32, -np.pi, np.pi)
    # nn.Linear default init: U(-1/sqrt(D_in), 1/sqrt(D_in))
    bound = 1.0 / np.sqrt(D_IN)
    weight = jax.random.uniform(k4, (H, D_IN), jnp.float32, -bound, bound)
    bias = jax.random.uniform(k5, (H,), jnp.float32, -bound, bound)
    return x, freq, phase_shift, weight, bias


if __name__ == "__main__":
    key = jax.random.PRNGKey(0)

    # Small shapes consistent with the module's forward (B, N, D_in) -> (B, N, H).
    B, N, D_IN, H = 2, 8, 16, 32
    x, freq, phase_shift, weight, bias = _make_inputs(key, B, N, D_IN, H)
    out = jax.block_until_ready(film_siren_forward(x, freq, phase_shift, weight, bias))
    ref = _reference(np.asarray(x), np.asarray(freq), np.asarray(phase_shift),
                     np.asarray(weight), np.asarray(bias))
    assert out.shape == (B, N, H)
    # Tolerance covers the bf16 MXU inputs (f32 accumulation, f32 FiLM + sin).
    np.testing.assert_allclose(np.asarray(out), ref, rtol=2e-2, atol=3e-2)

    # Second case with N not tile-aligned: exercises the partial edge block
    # (no wrapper pad/slice — Pallas masks the out-of-bounds rows).
    B2, N2 = 2, 50
    x2, f2, p2, w2, b2 = _make_inputs(jax.random.PRNGKey(1), B2, N2, D_IN, H)
    out2 = jax.block_until_ready(film_siren_forward(x2, f2, p2, w2, b2))
    ref2 = _reference(np.asarray(x2), np.asarray(f2), np.asarray(p2),
                      np.asarray(w2), np.asarray(b2))
    assert out2.shape == (B2, N2, H)
    np.testing.assert_allclose(np.asarray(out2), ref2, rtol=2e-2, atol=3e-2)

    print("KERNEL_OK")
</pallas_src>

<mosaic_0001>
module attributes {stable_mosaic.version = 11 : i64} {
  func.func @_film_siren_kernel(%arg0: i32, %arg1: i32, %arg2: memref<1x8x16xf32, #tpu.memory_space<vmem>>, %arg3: memref<16x32xbf16, #tpu.memory_space<vmem>>, %arg4: memref<1x1x32xf32, #tpu.memory_space<vmem>>, %arg5: memref<1x1x32xf32, #tpu.memory_space<vmem>>, %arg6: memref<1x8x32xf32, #tpu.memory_space<vmem>>) attributes {dimension_semantics = [#tpu.dimension_semantics<parallel>, #tpu.dimension_semantics<parallel>], iteration_bounds = array<i64: 2, 1>, scalar_prefetch = 0 : i64, scratch_operands = 0 : i64, tpu.core_type = #tpu.core_type<tc>, window_params = [{transform_indices = @transform_0, window_bounds = array<i64: 1, 8, 16>}, {pipeline_mode = #tpu.pipeline_mode<synchronous>, transform_indices = @transform_1, window_bounds = array<i64: 16, 32>}, {transform_indices = @transform_2, window_bounds = array<i64: 1, 1, 32>}, {transform_indices = @transform_3, window_bounds = array<i64: 1, 1, 32>}, {transform_indices = @transform_4, window_bounds = array<i64: 1, 8, 32>}]} {
    %c0 = arith.constant 0 : index
    %c0_0 = arith.constant 0 : index
    %c0_1 = arith.constant 0 : index
    %0 = vector.load %arg2[%c0, %c0_0, %c0_1] : memref<1x8x16xf32, #tpu.memory_space<vmem>>, vector<1x8x16xf32>
    %1 = vector.shape_cast %0 : vector<1x8x16xf32> to vector<8x16xf32>
    %2 = arith.truncf %1 : vector<8x16xf32> to vector<8x16xbf16>
    %c0_2 = arith.constant 0 : index
    %c0_3 = arith.constant 0 : index
    %3 = vector.load %arg3[%c0_2, %c0_3] : memref<16x32xbf16, #tpu.memory_space<vmem>>, vector<16x32xbf16>
    %cst = arith.constant dense<0.000000e+00> : vector<8x32xf32>
    %4 = tpu.matmul %2, %3, %cst {dimension_numbers = #tpu.dot_dimension_numbers<[1], [0], [0], [1], [0, 0, 1, 1], [], []>} : vector<8x16xbf16>, vector<16x32xbf16>, vector<8x32xf32> -> vector<8x32xf32>
    %c0_4 = arith.constant 0 : index
    %c0_5 = arith.constant 0 : index
    %c0_6 = arith.constant 0 : index
    %5 = vector.load %arg4[%c0_4, %c0_5, %c0_6] : memref<1x1x32xf32, #tpu.memory_space<vmem>>, vector<1x1x32xf32>
    %6 = vector.shape_cast %5 : vector<1x1x32xf32> to vector<1x32xf32>
    %7 = vector.broadcast %6 : vector<1x32xf32> to vector<8x32xf32>
    %8 = arith.mulf %7, %4 : vector<8x32xf32>
    %c0_7 = arith.constant 0 : index
    %c0_8 = arith.constant 0 : index
    %c0_9 = arith.constant 0 : index
    %9 = vector.load %arg5[%c0_7, %c0_8, %c0_9] : memref<1x1x32xf32, #tpu.memory_space<vmem>>, vector<1x1x32xf32>
    %10 = vector.shape_cast %9 : vector<1x1x32xf32> to vector<1x32xf32>
    %11 = vector.broadcast %10 : vector<1x32xf32> to vector<8x32xf32>
    %12 = arith.addf %8, %11 : vector<8x32xf32>
    %13 = math.sin %12 : vector<8x32xf32>
    %c0_10 = arith.constant 0 : index
    %c0_11 = arith.constant 0 : index
    %c0_12 = arith.constant 0 : index
    %14 = vector.load %arg6[%c0_10, %c0_11, %c0_12] : memref<1x8x32xf32, #tpu.memory_space<vmem>>, vector<1x8x32xf32>
    %15 = vector.shape_cast %14 : vector<1x8x32xf32> to vector<8x32xf32>
    %16 = vector.shape_cast %13 : vector<8x32xf32> to vector<1x8x32xf32>
    tpu.vector_store %arg6[%c0_10, %c0_11, %c0_12], %16 {strides = array<i32>} : memref<1x8x32xf32, #tpu.memory_space<vmem>>, vector<1x8x32xf32>,
    return
  }
  func.func @transform_0(%arg0: i32, %arg1: i32) -> (i32, i32, i32) {
    %c0_i32 = arith.constant 0 : i32
    %c0_i32_0 = arith.constant 0 : i32
    return %arg0, %arg1, %c0_i32 : i32, i32, i32
  }
  func.func @transform_1(%arg0: i32, %arg1: i32) -> (i32, i32) {
    %c0_i32 = arith.constant 0 : i32
    %c0_i32_0 = arith.constant 0 : i32
    %c0_i32_1 = arith.constant 0 : i32
    return %c0_i32, %c0_i32_0 : i32, i32
  }
  func.func @transform_2(%arg0: i32, %arg1: i32) -> (i32, i32, i32) {
    %c0_i32 = arith.constant 0 : i32
    %c0_i32_0 = arith.constant 0 : i32
    %c0_i32_1 = arith.constant 0 : i32
    return %arg0, %c0_i32, %c0_i32_0 : i32, i32, i32
  }
  func.func @transform_3(%arg0: i32, %arg1: i32) -> (i32, i32, i32) {
    %c0_i32 = arith.constant 0 : i32
    %c0_i32_0 = arith.constant 0 : i32
    %c0_i32_1 = arith.constant 0 : i32
    return %arg0, %c0_i32, %c0_i32_0 : i32, i32, i32
  }
  func.func @transform_4(%arg0: i32, %arg1: i32) -> (i32, i32, i32) {
    %c0_i32 = arith.constant 0 : i32
    %c0_i32_0 = arith.constant 0 : i32
    return %arg0, %arg1, %c0_i32 : i32, i32, i32
  }
}

</mosaic_0001>

<llo_original>
// kernel: tpu_custom_call.1
$region0: #{tpu_custom_call.1}
  #allocation0 [shape = 'u32[]', space=smem, size = 0x4, offset = 0x4, fixed_abs, tag = 'smem constant byte address 0x4 - core index']
  #allocation1 [shape = 'u32[72,128]{1,0:T(1,128)}', space=vmem, size = 0x9000, scoped, tag = 'internal scratch']
  %s0 = inlined_call_operand.hbm [shape: f32[2,8,16], index: 0, kind: input, shape index: {}]
  %s1 = inlined_call_operand.hbm [shape: bf16[16,32], index: 1, kind: input, shape index: {}]
  %s2 = inlined_call_operand.hbm [shape: f32[2,1,32], index: 2, kind: input, shape index: {}]
  %s3 = inlined_call_operand.vmem [shape: f32[2,1,32], index: 3, kind: input, shape index: {}]
  %s4 = inlined_call_operand.hbm [shape: f32[2,8,32], index: 4, kind: output, shape index: {}]
  %s5 = sld [smem:[#allocation0]]
  $region61: #{tpu_custom_call.1} parent=0
    _
  %s7 = ssub.s32 1, %s5
  %s8 = scalar_select 0, %s7, %s5
  $region1: #{tpu_custom_call.1} parent=0
    #allocation2 [shape = 'u8[8192]{0}', space=vmem, size = 0x2000, scoped, tag = 'input window, operand 0']
    #allocation3 [shape = 's32[2]{0}', space=sflag, size = 0x8, scoped, tag = 'scoped memory for tpu_custom_call.1']
    #allocation4 [shape = 's32[2]{0}', space=sflag, size = 0x8, scoped, tag = 'scoped memory for tpu_custom_call.1']
    #allocation5 [shape = 'u8[4096]{0}', space=vmem, size = 0x1000, scoped, tag = 'input window, operand 1, single buffered']
    #allocation6 [shape = 's32[1]{0}', space=sflag, size = 0x4, scoped, tag = 'scoped memory for tpu_custom_call.1']
    #allocation7 [shape = 'u8[1024]{0}', space=vmem, size = 0x400, scoped, tag = 'input window, operand 2']
    #allocation8 [shape = 'u8[8192]{0}', space=vmem, size = 0x2000, scoped, tag = 'output window, operand 0']
    %9 = vsyncpa [#allocation3], 0
    %s10 = scalar_lea.sflag [#allocation3], 1
    %11 = vsyncpa %s10, 0
    %12 = vsyncpa [#allocation6], 0
    %13 = vsyncpa [#allocation4], 0
    %s14 = scalar_lea.sflag [#allocation4], 1
    %15 = vsyncpa %s14, 0
    loop: start=0, step=1, limit=4
    $region2: #{tpu_custom_call.1} parent=1 // loop_pre_header
      _
    $region3: #{tpu_custom_call.1} parent=1 // loop_header
      %s17 = sphi 0, %s21
      %p18 = scmp.ge.s32.totalorder %s17, 4
      %s24 = sphi 0, %s36
      %s25 = sphi 0, %s32
      %s26 = sphi 0, %s24
      %s27 = sphi 0, %s25
      %s28 = sphi 0, %s26
      %s29 = sphi 0, %s27
      %s41 = sphi 0, %s43
      %s44 = sphi 0, %s41
      %s45 = sphi 0, %s44
      %s61 = sphi 0, %s45
      %s65 = sphi 0, %s65
      %s67 = sphi 0, %s65
      %s68 = sphi 0, %s67
      %s82 = sphi 0, %s68
      %s88 = sphi 0, %s90
      %s91 = sphi 0, %s88
      %s92 = sphi 0, %s91
      %s108 = sphi 0, %s92
      %s114 = sphi 0, %s116
      %s117 = sphi 0, %s114
      %s118 = sphi 0, %s117
      %s134 = sphi 0, %s118
      %s142 = sphi 0, %s144
      %s145 = sphi 0, %s142
      %s146 = sphi 0, %s145
      %s162 = sphi 0, %s146
    $region4: #{tpu_custom_call.1} parent=1 // loop_header_branch
      %20 = sbr.rel (%p18) target = $region8
    $region5: #{tpu_custom_call.1} parent=1 // loop_body
      %s22 = ssub.s32 %s17, 1
      %s23 = ssub.s32 %s17, 2
      %s30 = sadd.s32 1, %s25
      %p31 = scmp.ge.s32.totalorder %s30, 1
      %s32 = scalar_select %p31, 0, %s30
      %s33 = sadd.s32 1, %s24
      %s34 = scalar_select %p31, %s33, %s24
      %p35 = scmp.ge.s32.totalorder %s34, 2
      %s36 = scalar_select %p35, 0, %s34
      %s37 = ssub.s32 %s24, %s36
      %s38 = ssub.s32 %s25, %s32
      %s39 = sor.u32 %s37, %s38
      %p40 = scmp.eq.s32.totalorder %s39, 0
      %s42 = sadd.s32 %s41, 1
      %s43 = scalar_select %p40, %s41, %s42
      %p46 = pneg %p40
      %p47 = scmp.eq.s32.totalorder %s17, 1
      %p48 = por %p46, %p47
      %p49 = scmp.ne.s32.totalorder %s41, %s44
      %p50 = scmp.eq.s32.totalorder %s17, 0
      %p51 = por %p49, %p50
      %p52 = scmp.ne.s32.totalorder %s41, %s44
      %p53 = scmp.eq.s32.totalorder %s22, 1
      %p54 = por %p52, %p53
      %p55 = scmp.ne.s32.totalorder %s44, %s45
      %p56 = scmp.eq.s32.totalorder %s22, 0
      %p57 = por %p55, %p56
      %p58 = scmp.ne.s32.totalorder %s44, %s45
      %p59 = scmp.eq.s32.totalorder %s23, 1
      %p60 = por %p58, %p59
      %p62 = scmp.ne.s32.totalorder %s45, %s61
      %p63 = scmp.eq.s32.totalorder %s23, 0
      %p64 = por %p62, %p63
      %s66 = sadd.s32 %s65, 1
      %p69 = scmp.eq.s32.totalorder %s17, 1
      %p70 = scmp.ne.s32.totalorder %s65, %s67
      %p71 = scmp.eq.s32.totalorder %s17, 0
      %p72 = por %p70, %p71
      %p73 = scmp.ne.s32.totalorder %s65, %s67
      %p74 = scmp.eq.s32.totalorder %s22, 1
      %p75 = por %p73, %p74
      %p76 = scmp.ne.s32.totalorder %s67, %s68
      %p77 = scmp.eq.s32.totalorder %s22, 0
      %p78 = por %p76, %p77
      %p79 = scmp.ne.s32.totalorder %s67, %s68
      %p80 = scmp.eq.s32.totalorder %s23, 1
      %p81 = por %p79, %p80
      %p83 = scmp.ne.s32.totalorder %s68, %s82
      %p84 = scmp.eq.s32.totalorder %s23, 0
      %p85 = por %p83, %p84
      %s86 = ssub.s32 %s24, %s36
      %p87 = scmp.eq.s32.totalorder %s86, 0
      %s89 = sadd.s32 %s88, 1
      %s90 = scalar_select %p87, %s88, %s89
      %p93 = pneg %p87
      %p94 = scmp.eq.s32.totalorder %s17, 1
      %p95 = por %p93, %p94
      %p96 = scmp.ne.s32.totalorder %s88, %s91
      %p97 = scmp.eq.s32.totalorder %s17, 0
      %p98 = por %p96, %p97
      %p99 = scmp.ne.s32.totalorder %s88, %s91
      %p100 = scmp.eq.s32.totalorder %s22, 1
      %p101 = por %p99, %p100
      %p102 = scmp.ne.s32.totalorder %s91, %s92
      %p103 = scmp.eq.s32.totalorder %s22, 0
      %p104 = por %p102, %p103
      %p105 = scmp.ne.s32.totalorder %s91, %s92
      %p106 = scmp.eq.s32.totalorder %s23, 1
      %p107 = por %p105, %p106
      %p109 = scmp.ne.s32.totalorder %s92, %s108
      %p110 = scmp.eq.s32.totalorder %s23, 0
      %p111 = por %p109, %p110
      %s112 = ssub.s32 %s24, %s36
      %p113 = scmp.eq.s32.totalorder %s112, 0
      %s115 = sadd.s32 %s114, 1
      %s116 = scalar_select %p113, %s114, %s115
      %p119 = pneg %p113
      %p120 = scmp.eq.s32.totalorder %s17, 1
      %p121 = por %p119, %p120
      %p122 = scmp.ne.s32.totalorder %s114, %s117
      %p123 = scmp.eq.s32.totalorder %s17, 0
      %p124 = por %p122, %p123
      %p125 = scmp.ne.s32.totalorder %s114, %s117
      %p126 = scmp.eq.s32.totalorder %s22, 1
      %p127 = por %p125, %p126
      %p128 = scmp.ne.s32.totalorder %s117, %s118
      %p129 = scmp.eq.s32.totalorder %s22, 0
      %p130 = por %p128, %p129
      %p131 = scmp.ne.s32.totalorder %s117, %s118
      %p132 = scmp.eq.s32.totalorder %s23, 1
      %p133 = por %p131, %p132
      %p135 = scmp.ne.s32.totalorder %s118, %s134
      %p136 = scmp.eq.s32.totalorder %s23, 0
      %p137 = por %p135, %p136
      %s138 = ssub.s32 %s24, %s36
      %s139 = ssub.s32 %s25, %s32
      %s140 = sor.u32 %s138, %s139
      %p141 = scmp.eq.s32.totalorder %s140, 0
      %s143 = sadd.s32 %s142, 1
      %s144 = scalar_select %p141, %s142, %s143
      %p147 = pneg %p141
      %p148 = scmp.eq.s32.totalorder %s17, 1
      %p149 = por %p147, %p148
      %p150 = scmp.ne.s32.totalorder %s142, %s145
      %p151 = scmp.eq.s32.totalorder %s17, 0
      %p152 = por %p150, %p151
      %p153 = scmp.ne.s32.totalorder %s142, %s145
      %p154 = scmp.eq.s32.totalorder %s22, 1
      %p155 = por %p153, %p154
      %p156 = scmp.ne.s32.totalorder %s145, %s146
      %p157 = scmp.eq.s32.totalorder %s22, 0
      %p158 = por %p156, %p157
      %p159 = scmp.ne.s32.totalorder %s145, %s146
      %p160 = scmp.eq.s32.totalorder %s23, 1
      %p161 = por %p159, %p160
      %p163 = scmp.ne.s32.totalorder %s146, %s162
      %p164 = scmp.eq.s32.totalorder %s23, 0
      %p165 = por %p163, %p164
      %p166 = scmp.le.s32.totalorder 1, %s17
      %p167 = scmp.lt.s32.totalorder %s17, 3
      %p168 = pnand %p166, %p167
      %p169 = pneg %p168
      // Predicated region
      $region9: #{tpu_custom_call.1} parent=5 // pred_check
        _
      $region10: #{tpu_custom_call.1} parent=5 // pred_check_branch
        %171 = sbr.rel (%p168) target = $region12
      $region11: #{tpu_custom_call.1} parent=5 // pred_region
        %s172 = ssub.s32 %s17, 1
        // Predicated region
        $region13: #{tpu_custom_call.1} parent=11 // pred_check
          %p173 = pneg %p78
        $region14: #{tpu_custom_call.1} parent=11 // pred_check_branch
          %175 = sbr.rel (%p173) target = $region16
        $region15: #{tpu_custom_call.1} parent=11 // pred_region
          %177 = vsyncadd [#allocation6], 0
          %s178 = sshll.u32 %s1, 4
          %s179 = int_to_ptr.hbm [resolvable:$true] %s178
          %s180 = sshll.u32 [#allocation5], 4
          %s181 = int_to_ptr.vmem [resolvable:$true] %s180
          %186 = dma.hbm_to_vmem [thread:$0]  %s179, 128, %s181, [#allocation6], 64, 64, 4
        $region16: #{tpu_custom_call.1} parent=11 // pred_fallthru
          _
      $region12: #{tpu_custom_call.1} parent=5 // pred_fallthru
        _
      %p187 = scmp.lt.s32.totalorder %s17, 2
      // Predicated region
      $region17: #{tpu_custom_call.1} parent=5 // pred_check
        %p188 = pneg %p187
      $region18: #{tpu_custom_call.1} parent=5 // pred_check_branch
        %190 = sbr.rel (%p188) target = $region20
      $region19: #{tpu_custom_call.1} parent=5 // pred_region
        // Predicated region
        $region21: #{tpu_custom_call.1} parent=19 // pred_check
          %p191 = pneg %p51
        $region22: #{tpu_custom_call.1} parent=19 // pred_check_branch
          %193 = sbr.rel (%p191) target = $region24
        $region23: #{tpu_custom_call.1} parent=19 // pred_region
          %s194 = sand.u32 %s17, 1
          %s195 = scalar_lea.sflag [#allocation3], %s194
          %s196 = sand.u32 %s41, 1
          %s197 = smul.addr %s196, 8
          %s198 = scalar_lea.vmem [#allocation2], %s197
          %200 = vsyncadd %s195, 0
          %s201 = sadd.s32 %s25, %s24
          %s202 = smul.addr %s201, 8
          %s203 = scalar_lea.hbm %s0, %s202
          %s205 = sshll.u32 %s203, 4
          %s206 = int_to_ptr.hbm [resolvable:$true] %s205
          %s207 = sshll.u32 %s198, 4
          %s208 = int_to_ptr.vmem [resolvable:$true] %s207
          %210 = dma.hbm_to_vmem [thread:$0]  %s206, 128, %s208, %s195
        $region24: #{tpu_custom_call.1} parent=19 // pred_fallthru
          _
        // Predicated region
        $region25: #{tpu_custom_call.1} parent=19 // pred_check
          %p211 = pneg %p98
        $region26: #{tpu_custom_call.1} parent=19 // pred_check_branch
          %213 = sbr.rel (%p211) target = $region28
        $region27: #{tpu_custom_call.1} parent=19 // pred_region
          %s214 = sand.u32 %s17, 1
          %s215 = scalar_lea.sflag [#allocation3], %s214
          %s216 = sand.u32 %s88, 1
          %s217 = scalar_lea.vmem [#allocation7], %s216
          %219 = vsyncadd %s215, 0
          %s220 = scalar_lea.hbm %s2, %s24
          %s222 = sshll.u32 %s220, 4
          %s223 = int_to_ptr.hbm [resolvable:$true] %s222
          %s224 = sshll.u32 %s217, 4
          %s225 = int_to_ptr.vmem [resolvable:$true] %s224
          %227 = dma.hbm_to_vmem [thread:$0]  %s223, 16, %s225, %s215
        $region28: #{tpu_custom_call.1} parent=19 // pred_fallthru
          _
        // Predicated region
        $region29: #{tpu_custom_call.1} parent=19 // pred_check
          %p228 = pneg %p124
        $region30: #{tpu_custom_call.1} parent=19 // pred_check_branch
          %230 = sbr.rel (%p228) target = $region32
        $region31: #{tpu_custom_call.1} parent=19 // pred_region
          %p231 = scmp.lt.s32.totalorder %s24, 1
          %s232 = scalar_select %p231, %s24, 1
          %s233 = scalar_lea.vmem %s3, %s232
        $region32: #{tpu_custom_call.1} parent=19 // pred_fallthru
          _
      $region20: #{tpu_custom_call.1} parent=5 // pred_fallthru
        _
      %p234 = scmp.le.s32.totalorder 1, %s17
      %p235 = scmp.lt.s32.totalorder %s17, 3
      %p236 = pnand %p234, %p235
      %p237 = pneg %p236
      // Predicated region
      $region33: #{tpu_custom_call.1} parent=5 // pred_check
        _
      $region34: #{tpu_custom_call.1} parent=5 // pred_check_branch
        %239 = sbr.rel (%p236) target = $region36
      $region35: #{tpu_custom_call.1} parent=5 // pred_region
        %s240 = ssub.s32 %s17, 1
        %s241 = sand.u32 %s22, 1
        %s242 = scalar_lea.sflag [#allocation3], %s241
        %s243 = sand.u32 %s44, 1
        %s244 = smul.addr %s243, 8
        %s245 = scalar_lea.vmem [#allocation2], %s244
        // Predicated region
        $region37: #{tpu_custom_call.1} parent=35 // pred_check
          %p246 = pneg %p57
        $region38: #{tpu_custom_call.1} parent=35 // pred_check_branch
          %248 = sbr.rel (%p246) target = $region40
        $region39: #{tpu_custom_call.1} parent=35 // pred_region
          %250 = dma.done %s242, 128
        $region40: #{tpu_custom_call.1} parent=35 // pred_fallthru
          _
        // Predicated region
        $region41: #{tpu_custom_call.1} parent=35 // pred_check
          %p251 = pneg %p78
        $region42: #{tpu_custom_call.1} parent=35 // pred_check_branch
          %253 = sbr.rel (%p251) target = $region44
        $region43: #{tpu_custom_call.1} parent=35 // pred_region
          %255 = dma.done [#allocation6], 128
        $region44: #{tpu_custom_call.1} parent=35 // pred_fallthru
          _
        %s256 = sand.u32 %s22, 1
        %s257 = scalar_lea.sflag [#allocation3], %s256
        %s258 = sand.u32 %s91, 1
        %s259 = scalar_lea.vmem [#allocation7], %s258
        // Predicated region
        $region45: #{tpu_custom_call.1} parent=35 // pred_check
          %p260 = pneg %p104
        $region46: #{tpu_custom_call.1} parent=35 // pred_check_branch
          %262 = sbr.rel (%p260) target = $region48
        $region47: #{tpu_custom_call.1} parent=35 // pred_region
          %264 = dma.done %s257, 16
        $region48: #{tpu_custom_call.1} parent=35 // pred_fallthru
          _
        %s265 = sand.u32 %s22, 1
        %s266 = scalar_lea.sflag [#allocation3], %s265
        %s267 = sand.u32 %s44, 1
        %s268 = smul.addr %s267, 8
        %s269 = scalar_lea.vmem [#allocation2], %s268
        %p270 = pneg %p57
        %p271 = pneg %p54
        %p272 = pneg %p78
        %p273 = pneg %p75
        %s274 = sand.u32 %s22, 1
        %s275 = scalar_lea.sflag [#allocation3], %s274
        %s276 = sand.u32 %s91, 1
        %s277 = scalar_lea.vmem [#allocation7], %s276
        %p278 = pneg %p104
        %p279 = pneg %p101
        %p280 = scmp.lt.s32.totalorder %s26, 1
        %s281 = scalar_select %p280, %s26, 1
        %s282 = scalar_lea.vmem %s3, %s281
        %p283 = pneg %p130
        %p284 = pneg %p127
        %p285 = pneg %p158
        %p286 = pneg %p155
        %s287 = sand.u32 %s145, 1
        %s288 = scalar_lea.sflag [#allocation4], %s287
        %s289 = sand.u32 %s145, 1
        %s290 = smul.addr %s289, 8
        %s291 = scalar_lea.vmem [#allocation8], %s290
        %p292 = scmp.lt.s32.totalorder %s26, 1
        %s293 = scalar_select %p292, %s26, 1
        %s294 = scalar_lea.vmem %s3, %s293
        %v296 = vld [vmem:[%s245] sm:$0xff]
        %v297 = vpack.c.bf16 %v296, %v296
        %v298 = vld [vmem:[#allocation5] sm:$0xf]
        %v299 = vld [vmem:[#allocation5 + $0x4] sm:$0xf]
        %v302 = vunpack.c.l.b16 %v298
        %v303 = vunpack.c.l.b16 %v299
        %v304 = vpack.c.b16 %v303, %v302
        %vm306 = vcmask 130048
        %v308 = vsel %vm306, %v297, 0
        %310 = vmatpush.bf16.msra.mxu0 0
        %311 = vmatpush.bf16.msra.mxu0 0
        %312 = vmatpush.bf16.msra.mxu0 0
        %313 = vmatpush.bf16.msra.mxu0 0
        %314 = vmatpush.bf16.msra.mxu0 0
        %315 = vmatpush.bf16.msra.mxu0 0
        %316 = vmatpush.bf16.msra.mxu0 0
        %317 = vmatpush.bf16.msra.mxu0 %v304
        %318 = vmatmul.bf16.gmra.mxu0 %v308
        %v319 = vpop.f32.mrf.mxu0
        %v320 = vadd.f32 0.0, %v319
        %v321 = vpop.f32.mrf.mxu0
        %322 = vdwg.mxu0
        %v323 = vld [vmem:[%s259] sm:$0x1]
        %v325 = vperm.slane %v323, 0
        %v327 = vmul.f32 %v325, %v320
        %v328 = vld [vmem:[%s294] sm:$0x1]
        %v330 = vperm.slane %v328, 0
        %v332 = vadd.f32 %v327, %v330
        %v333 = vand.u32 2147483647, %v332
        %vm334 = vcmp.le.f32.partialorder %v333, 0.7853982
        %vm335 = vcmp.lt.s32.totalorder %v332, 0
        %v336 = vand.u32 %v332, 2139095040
        %v337 = vshrl.u32 %v336, 23
        %v338 = vsub.s32 %v337, 127
        %v339 = vand.u32 2147483647, %v332
        %v340 = vand.u32 %v339, 8388607
        %v341 = vor.u32 %v340, 8388608
        %v342 = vsub.s32 0, %v341
        %v343 = vadd.s32 %v338, 1
        %vm344 = vcmp.gt.s32.totalorder %v343, 0
        %v345 = vsel %vm344, %v343, 0
        %v346 = vshrl.u32 %v345, 5
        %v347 = vand.u32 %v345, 31
        %v348 = vsub.s32 32, %v347
        %v349 = vshrl.u32 683565275, %v348
        %v350 = vshll.u32 683565275, %v347
        %v351 = vshrl.u32 2475754826, %v348
        %v352 = vor.u32 %v350, %v351
        %v353 = vshll.u32 2475754826, %v347
        %v354 = vshrl.u32 2131351028, %v348
        %v355 = vor.u32 %v353, %v354
        %v356 = vshll.u32 2131351028, %v347
        %v357 = vshrl.u32 2102212464, %v348
        %v358 = vor.u32 %v356, %v357
        %v359 = vshll.u32 2102212464, %v347
        %v360 = vshrl.u32 920167782, %v348
        %v361 = vor.u32 %v359, %v360
        %v362 = vshll.u32 920167782, %v347
        %v363 = vshrl.u32 1326507024, %v348
        %v364 = vor.u32 %v362, %v363
        %vm365 = vcmp.lt.s32.totalorder %v346, 1
        %vm366 = vcmp.lt.s32.totalorder %v346, 2
        %vm367 = vcmp.lt.s32.totalorder %v346, 3
        %vm368 = vcmp.lt.s32.totalorder %v346, 4
        %v369 = vsel %vm365, %v349, %v352
        %v370 = vsel %vm368, %v358, 2102212464
        %v371 = vsel %vm367, %v355, %v370
        %v372 = vsel %vm366, %v369, %v371
        %v373 = vsel %vm365, %v352, %v355
        %v374 = vsel %vm368, %v361, 920167782
        %v375 = vsel %vm367, %v358, %v374
        %v376 = vsel %vm366, %v373, %v375
        %v377 = vsel %vm365, %v355, %v358
        %v378 = vsel %vm368, %v364, 1326507024
        %v379 = vsel %vm367, %v361, %v378
        %v380 = vsel %vm366, %v377, %v379
        %v381 = vshll.u32 %v341, 8
        %v382 = vand.u32 %v381, 65535
        %v383 = vshrl.u32 %v381, 16
        %v384 = vand.u32 %v380, 65535
        %v385 = vshrl.u32 %v380, 16
        %v386 = vmul.u32 %v382, %v384
        %v387 = vmul.u32 %v382, %v385
        %v388 = vmul.u32 %v383, %v384
        %v389 = vmul.u32 %v383, %v385
        %v390 = vshll.u32 %v387, 16
        %v391 = vshrl.u32 %v387, 16
        %v392 = vshll.u32 %v388, 16
        %v393 = vshrl.u32 %v388, 16
        %vm394 = vc.u32 %v386, %v390
        %v395 = vsel %vm394, 1, 0
        %v396 = vadd.s32 %v386, %v390
        %v397 = vadd.s32 %v389, %v395
        %vm398 = vc.u32 %v396, %v392
        %v399 = vsel %vm398, 1, 0
        %v400 = vadd.s32 %v396, %v392
        %v401 = vadd.s32 %v397, %v399
        %v402 = vadd.s32 %v401, %v391
        %v403 = vadd.s32 %v402, %v393
        %v404 = vand.u32 %v381, 65535
        %v405 = vshrl.u32 %v381, 16
        %v406 = vand.u32 %v376, 65535
        %v407 = vshrl.u32 %v376, 16
        %v408 = vmul.u32 %v404, %v406
        %v409 = vmul.u32 %v404, %v407
        %v410 = vmul.u32 %v405, %v406
        %v411 = vmul.u32 %v405, %v407
        %v412 = vshll.u32 %v409, 16
        %v413 = vshrl.u32 %v409, 16
        %v414 = vshll.u32 %v410, 16
        %v415 = vshrl.u32 %v410, 16
        %vm416 = vc.u32 %v408, %v412
        %v417 = vsel %vm416, 1, 0
        %v418 = vadd.s32 %v408, %v412
        %v419 = vadd.s32 %v411, %v417
        %vm420 = vc.u32 %v418, %v414
        %v421 = vsel %vm420, 1, 0
        %v422 = vadd.s32 %v418, %v414
        %v423 = vadd.s32 %v419, %v421
        %v424 = vadd.s32 %v423, %v413
        %v425 = vadd.s32 %v424, %v415
        %v426 = vmul.u32 %v381, %v372
        %v427 = vadd.s32 %v403, %v422
        %vm428 = vc.u32 %v403, %v422
        %v429 = vadd.s32 %v425, 1
        %v430 = vsel %vm428, %v429, %v425
        %v431 = vadd.s32 %v426, %v430
        %v432 = vadd.s32 %v431, 536870912
        %v433 = vshrl.u32 %v432, 30
        %v434 = vshll.u32 %v433, 30
        %v435 = vsub.s32 %v431, %v434
        %vm436 = vcmp.lt.s32.totalorder %v435, 0
        %v437 = vsub.s32 0, %v435
        %v438 = vsel %vm436, %v437, %v435
        %v439 = vclz %v438
        %v440 = vsub.s32 %v439, 2
        %vm441 = vcmp.gt.s32.totalorder 0, %v440
        %v442 = vsel %vm441, 0, %v440
        %v443 = vsub.s32 32, %v442
        %v444 = vshll.u32 %v435, %v442
        %v445 = vshrl.u32 %v427, %v443
        %v446 = vor.u32 %v444, %v445
        %v447 = vsub.s32 4294967266, %v442
        %v448 = vadd.s32 %v447, 127
        %v449 = vshll.u32 %v448, 23
        %v450 = vor.u32 4788187, %v449
        %v451 = vand.u32 2147483647, %v450
        %v453 = vcvt.s32.f32 %v446
        %v454 = vmul.f32 %v453, %v451
        %v455 = vxor.u32 %v454, 2147483648
        %v456 = vsel %vm335, %v455, %v454
        %v457 = vsub.s32 4, %v433
        %v458 = vsel %vm335, %v457, %v433
        %v459 = vsel %vm334, %v332, %v456
        %v460 = vsel %vm334, 0, %v458
        %v461 = vmul.f32 %v459, %v459
        %v462 = vmul.f32 %v461, -0.001358992
        %v463 = vadd.f32 %v462, 0.041655596
        %v464 = vmul.f32 %v461, %v463
        %v465 = vadd.f32 %v464, -0.4999988
        %v466 = vmul.f32 %v461, %v465
        %v467 = vadd.f32 1.0, %v466
        %v468 = vmul.f32 %v459, %v459
        %v469 = vmul.f32 %v468, -0.00019511016
        %v470 = vadd.f32 %v469, 0.008332121
        %v471 = vmul.f32 %v468, %v470
        %v472 = vadd.f32 %v471, -0.16666654
        %v473 = vmul.f32 %v468, %v472
        %v474 = vadd.f32 %v473, 1.0
        %v475 = vmul.f32 %v474, %v459
        %vm476 = vweird.f32 %v332
        %v477 = vadd.s32 %v460, 3
        %v478 = vand.u32 %v477, 3
        %vm479 = vcmp.lt.s32.totalorder %v478, 2
        %vm480 = vcmp.eq.s32.totalorder %v478, 0
        %v481 = vxor.u32 %v475, 2147483648
        %v482 = vsel %vm480, %v467, %v481
        %vm483 = vcmp.eq.s32.totalorder %v478, 2
        %v484 = vxor.u32 %v467, 2147483648
        %v485 = vsel %vm483, %v484, %v475
        %v486 = vsel %vm479, %v482, %v485
        %v487 = vsel %vm476, nan, %v486
        %vm488 = vcmask 261120
        %489 = vst.msk [vmem:[%s291] sm:$0xff] %vm488, %v487
        %s490 = sand.u32 %s145, 1
        %s491 = scalar_lea.sflag [#allocation4], %s490
        %s492 = sand.u32 %s145, 1
        %s493 = smul.addr %s492, 8
        %s494 = scalar_lea.vmem [#allocation8], %s493
        // Predicated region
        $region49: #{tpu_custom_call.1} parent=35 // pred_check
          %p495 = pneg %p155
        $region50: #{tpu_custom_call.1} parent=35 // pred_check_branch
          %497 = sbr.rel (%p495) target = $region52
        $region51: #{tpu_custom_call.1} parent=35 // pred_region
          %499 = vsyncadd %s491, 0
          %s500 = sadd.s32 %s27, %s26
          %s501 = smul.addr %s500, 8
          %s502 = scalar_lea.hbm %s4, %s501
          %s504 = sshll.u32 %s494, 4
          %s505 = int_to_ptr.vmem [resolvable:$true] %s504
          %s506 = sshll.u32 %s502, 4
          %s507 = int_to_ptr.hbm [resolvable:$true] %s506
          %509 = dma.vmem_to_hbm [thread:$0]  %s505, 128, %s507, %s491
        $region52: #{tpu_custom_call.1} parent=35 // pred_fallthru
          _
      $region36: #{tpu_custom_call.1} parent=5 // pred_fallthru
        _
      %p510 = scmp.le.s32.totalorder 2, %s17
      // Predicated region
      $region53: #{tpu_custom_call.1} parent=5 // pred_check
        %p511 = pneg %p510
      $region54: #{tpu_custom_call.1} parent=5 // pred_check_branch
        %513 = sbr.rel (%p511) target = $region56
      $region55: #{tpu_custom_call.1} parent=5 // pred_region
        %s514 = ssub.s32 %s17, 2
        // Predicated region
        $region57: #{tpu_custom_call.1} parent=55 // pred_check
          %p515 = pneg %p161
        $region58: #{tpu_custom_call.1} parent=55 // pred_check_branch
          %517 = sbr.rel (%p515) target = $region60
        $region59: #{tpu_custom_call.1} parent=55 // pred_region
          %s518 = sand.u32 %s146, 1
          %s519 = scalar_lea.sflag [#allocation4], %s518
          %s520 = sand.u32 %s146, 1
          %s521 = smul.addr %s520, 8
          %s522 = scalar_lea.vmem [#allocation8], %s521
          %524 = dma.done %s519, 128
        $region60: #{tpu_custom_call.1} parent=55 // pred_fallthru
          _
      $region56: #{tpu_custom_call.1} parent=5 // pred_fallthru
        _
    $region6: #{tpu_custom_call.1} parent=1 // loop_footer
      %s21 = sadd.s32 1, %s17
    $region7: #{tpu_custom_call.1} parent=1 // loop_footer_branch
      %16 = sbr.rel target = $region3
    $region8: #{tpu_custom_call.1} parent=1 // loop_exit
      _
    %525 = vsyncpa [#allocation3], 1
    %s526 = scalar_lea.sflag [#allocation3], 1
    %527 = vsyncpa %s526, 1
    %528 = vsyncpa [#allocation6], 1
    %529 = vsyncpa [#allocation4], 1
    %s530 = scalar_lea.sflag [#allocation4], 1
    %531 = vsyncpa %s530, 1

</llo_original>
